<compile_context>
chip_gen: v7x
topology: tpu7x:2x2x1
jax: 0.10.0
libtpu: 0.0.40
codegen_flags: <defaults>
</compile_context>

<pallas_src>
import functools

import jax
import jax.numpy as jnp
from jax.experimental import pallas as pl
from jax.experimental.pallas import tpu as pltpu


def _round_up(x, m):
    return ((x + m - 1) // m) * m


def mlp_kernel(x_ref, w1_ref, b1_ref, w2_ref, b2_ref, o_ref, acc_ref):
    """One (batch-tile, hidden-chunk) step of relu(relu(x@W1+b1)@W2+b2)."""
    j = pl.program_id(1)

    @pl.when(j == 0)
    def _():
        acc_ref[...] = jnp.zeros_like(acc_ref)

    # fc1 chunk: bf16 MXU operands, f32 accumulation; bias + ReLU in f32.
    x_bf = x_ref[...].astype(jnp.bfloat16)        # in-register cast, no HBM pass
    h = jnp.dot(x_bf, w1_ref[...], preferred_element_type=jnp.float32)
    h = jnp.maximum(h + b1_ref[...], 0.0)         # (tb, th) + (1, th)

    # fc2 partial product, accumulated over hidden chunks in f32.
    acc_ref[...] += jnp.dot(h.astype(jnp.bfloat16), w2_ref[...],
                            preferred_element_type=jnp.float32)

    @pl.when(j == pl.num_programs(1) - 1)
    def _():
        o_ref[...] = jnp.maximum(acc_ref[...] + b2_ref[...],
                                 0.0).astype(o_ref.dtype)


def prepare_params(w1, b1, w2, b2):
    """One-time parameter prep (call once at init, NOT per forward call).

    Pads the hidden dim to a multiple of 128 (zero padding -> exact result) and
    casts the matmul operands to bf16. Biases stay f32.
    """
    D, H = w1.shape
    C = w2.shape[1]
    H_pad = _round_up(H, 128)
    b1 = jnp.reshape(b1, (1, H)).astype(jnp.float32)
    b2 = jnp.reshape(b2, (1, C)).astype(jnp.float32)
    w1 = w1.astype(jnp.bfloat16)
    w2 = w2.astype(jnp.bfloat16)
    if H_pad != H:
        w1 = jnp.zeros((D, H_pad), jnp.bfloat16).at[:, :H].set(w1)
        b1 = jnp.zeros((1, H_pad), jnp.float32).at[:, :H].set(b1)
        w2 = jnp.zeros((H_pad, C), jnp.bfloat16).at[:H, :].set(w2)
    return w1, b1, w2, b2


def _plan(B, D, H_pad, C, tb_override, th_override):
    """Static (trace-time) tile plan from shapes + VMEM capacity."""
    try:
        vmem_cap = int(pltpu.get_tpu_info().vmem_capacity_bytes)
    except Exception:
        vmem_cap = 64 * 1024 * 1024        # conservative: v7x per-TC VMEM
    budget = vmem_cap // 2                 # leave headroom for the compiler

    def weight_bytes(th):
        # x2: BlockSpec inputs are double-buffered even with constant index maps.
        return 2 * (D * th * 2 + th * 4 + th * C * 2 + C * 4)

    def per_row_bytes(th):
        # Double-buffered f32 x / f32 out streams, plus in-kernel temporaries:
        # bf16 x, f32 hidden, bf16 hidden recast, f32 accumulator.
        return 2 * D * 4 + 2 * C * 4 + D * 2 + th * 4 + th * 2 + C * 4

    # Hidden-chunk size: keep both weight matrices fully VMEM-resident when
    # they fit; otherwise tile the hidden dim ("arbitrary" axis + accumulator).
    if th_override is not None:
        th = th_override
    else:
        n128 = H_pad // 128
        th = None
        for d in range(n128, 0, -1):
            if n128 % d:
                continue
            cand = 128 * d
            if weight_bytes(cand) <= budget // 2:
                th = cand
                break
        if th is None:
            # TODO(synk): also tile the input dimension D (second reduction
            # axis) for fc1 weights that exceed VMEM even at a 128-wide chunk.
            raise ValueError(
                "NeuralLayer weights too large for VMEM-resident chunks: "
                f"D={D}, H_pad={H_pad}, C={C}, vmem_budget={budget} bytes")
    assert th % 128 == 0 or th == H_pad
    assert H_pad % th == 0

    if tb_override is not None:
        tb = tb_override
    else:
        tb = (budget - weight_bytes(th)) // per_row_bytes(th)
        tb = min(tb, 1024)
        if B > 16:
            # >= 2 batch steps so the "parallel" axis can shard across both
            # TensorCores on v7x (free for mem-bound shapes on v5e/v6e).
            tb = min(tb, _round_up(pl.cdiv(B, 2), 16))
        tb = max(16, (tb // 16) * 16)      # bf16-friendly sublane multiple
    if tb >= B:
        tb = B                             # single full-batch block

    footprint = weight_bytes(th) + tb * per_row_bytes(th)
    vmem_limit = int(min(max(footprint + (4 << 20), 32 << 20),
                         (vmem_cap * 9) // 10))
    return tb, th, vmem_limit


@functools.partial(jax.jit, static_argnames=("tb_override", "th_override"))
def neural_layer_forward(x, w1_p, b1_p, w2_p, b2_p, *,
                         tb_override=None, th_override=None):
    """relu(relu(x @ w1 + b1) @ w2 + b2) — fused 2-layer MLP, one pallas_call.

    x    : (B, D) float32 (streamed, cast to bf16 inside the kernel)
    w1_p : (D, H_pad) bf16, b1_p: (1, H_pad) f32   (from prepare_params)
    w2_p : (H_pad, C) bf16, b2_p: (1, C)     f32
    returns (B, C) float32
    """
    B, D = x.shape
    D_w, H_pad = w1_p.shape
    C = w2_p.shape[1]
    assert D == D_w, (D, D_w)

    tb, th, vmem_limit = _plan(B, D, H_pad, C, tb_override, th_override)
    nb = pl.cdiv(B, tb)
    nh = H_pad // th

    cost = pl.CostEstimate(
        flops=2 * B * (D * H_pad + H_pad * C),
        transcendentals=0,
        bytes_accessed=(B * D * 4 + B * C * 4
                        + (nb if nh > 1 else 1)
                        * (w1_p.size * 2 + b1_p.size * 4
                           + w2_p.size * 2 + b2_p.size * 4)),
    )

    return pl.pallas_call(
        mlp_kernel,
        out_shape=jax.ShapeDtypeStruct((B, C), jnp.float32),
        grid=(nb, nh),
        in_specs=[
            pl.BlockSpec((tb, D), lambda i, j: (i, 0)),   # x batch tile (f32)
            pl.BlockSpec((D, th), lambda i, j: (0, j)),   # w1 hidden chunk
            pl.BlockSpec((1, th), lambda i, j: (0, j)),   # b1 hidden chunk
            pl.BlockSpec((th, C), lambda i, j: (j, 0)),   # w2 hidden chunk
            pl.BlockSpec((1, C), lambda i, j: (0, 0)),    # b2 (resident)
        ],
        out_specs=pl.BlockSpec((tb, C), lambda i, j: (i, 0)),
        scratch_shapes=[pltpu.VMEM((tb, C), jnp.float32)],
        compiler_params=pltpu.CompilerParams(
            dimension_semantics=("parallel", "arbitrary"),
            vmem_limit_bytes=vmem_limit),
        cost_estimate=cost,
    )(x, w1_p, b1_p, w2_p, b2_p)


def init_params(key, input_dimension, intermediate_dimension, num_classes):
    """Deterministic synthetic init (PyTorch-style uniform bounds)."""
    k1, k2, k3, k4 = jax.random.split(key, 4)
    bound1 = 1.0 / jnp.sqrt(input_dimension)
    bound2 = 1.0 / jnp.sqrt(intermediate_dimension)
    # Stored as (in, out) so the kernel does x @ W.
    w1 = jax.random.uniform(k1, (input_dimension, intermediate_dimension),
                            jnp.float32, -bound1, bound1)
    b1 = jax.random.uniform(k2, (1, intermediate_dimension),
                            jnp.float32, -bound1, bound1)
    w2 = jax.random.uniform(k3, (intermediate_dimension, num_classes),
                            jnp.float32, -bound2, bound2)
    b2 = jax.random.uniform(k4, (1, num_classes),
                            jnp.float32, -bound2, bound2)
    return w1, b1, w2, b2


def _reference_bf16(x, w1, b1, w2, b2):
    """Pure-JAX reference with the same bf16-operand / f32-accumulate recipe."""
    h = jnp.maximum(
        jnp.dot(x.astype(jnp.bfloat16), w1.astype(jnp.bfloat16),
                preferred_element_type=jnp.float32) + b1.reshape(1, -1), 0.0)
    return jnp.maximum(
        jnp.dot(h.astype(jnp.bfloat16), w2.astype(jnp.bfloat16),
                preferred_element_type=jnp.float32) + b2.reshape(1, -1), 0.0)


if __name__ == "__main__":
    key = jax.random.PRNGKey(0)
    kx, kp, kx2, kp2 = jax.random.split(key, 4)

    # --- case 1: small shapes (single-step grid, weights fully resident) -----
    B, D, H, C = 8, 32, 64, 16
    x = jax.random.normal(kx, (B, D), jnp.float32)
    w1, b1, w2, b2 = init_params(kp, D, H, C)
    params = prepare_params(w1, b1, w2, b2)          # one-time init cost
    out = jax.block_until_ready(neural_layer_forward(x, *params))

    ref_bf16 = _reference_bf16(x, w1, b1, w2, b2)
    ref_f32 = jnp.maximum(jnp.maximum(x @ w1 + b1, 0.0) @ w2 + b2, 0.0)
    assert out.shape == (B, C)
    assert jnp.allclose(out, ref_bf16, atol=1e-4, rtol=1e-4)
    assert jnp.allclose(out, ref_f32, atol=3e-2, rtol=3e-2)

    # --- case 2: force multi-step grid on both axes (batch write-masking and
    # the hidden-dim accumulator / tiled-weights fallback path) ----------------
    B2, D2, H2, C2 = 40, 48, 256, 24
    x2 = jax.random.normal(kx2, (B2, D2), jnp.float32)
    raw2 = init_params(kp2, D2, H2, C2)
    params2 = prepare_params(*raw2)
    out2 = jax.block_until_ready(
        neural_layer_forward(x2, *params2, tb_override=16, th_override=128))
    ref2 = _reference_bf16(x2, *raw2)
    assert out2.shape == (B2, C2)
    assert jnp.allclose(out2, ref2, atol=1e-3, rtol=1e-3)

    print("KERNEL_OK")
</pallas_src>

<mosaic_0001>
module attributes {stable_mosaic.version = 11 : i64} {
  func.func @mlp_kernel(%arg0: i32, %arg1: i32, %arg2: memref<8x32xf32, #tpu.memory_space<vmem>>, %arg3: memref<32x128xbf16, #tpu.memory_space<vmem>>, %arg4: memref<1x128xf32, #tpu.memory_space<vmem>>, %arg5: memref<128x16xbf16, #tpu.memory_space<vmem>>, %arg6: memref<1x16xf32, #tpu.memory_space<vmem>>, %arg7: memref<8x16xf32, #tpu.memory_space<vmem>>, %arg8: memref<8x16xf32, #tpu.memory_space<vmem>>) attributes {dimension_semantics = [#tpu.dimension_semantics<parallel>, #tpu.dimension_semantics<arbitrary>], iteration_bounds = array<i64: 1, 1>, scalar_prefetch = 0 : i64, scratch_operands = 1 : i64, tpu.core_type = #tpu.core_type<tc>, window_params = [{transform_indices = @transform_0, window_bounds = array<i64: 8, 32>}, {transform_indices = @transform_1, window_bounds = array<i64: 32, 128>}, {transform_indices = @transform_2, window_bounds = array<i64: 1, 128>}, {transform_indices = @transform_3, window_bounds = array<i64: 128, 16>}, {pipeline_mode = #tpu.pipeline_mode<synchronous>, transform_indices = @transform_4, window_bounds = array<i64: 1, 16>}, {transform_indices = @transform_5, window_bounds = array<i64: 8, 16>}]} {
    %c0_i32 = arith.constant 0 : i32
    %0 = arith.cmpi eq, %arg1, %c0_i32 : i32
    %1 = arith.extui %0 : i1 to i32
    %c0_i32_0 = arith.constant 0 : i32
    %2 = arith.cmpi ne, %1, %c0_i32_0 : i32
    scf.if %2 {
      %cst_16 = arith.constant 0.000000e+00 : f32
      %21 = vector.broadcast %cst_16 : f32 to vector<8x16xf32>
      %c0_17 = arith.constant 0 : index
      %c0_18 = arith.constant 0 : index
      %22 = vector.load %arg8[%c0_17, %c0_18] : memref<8x16xf32, #tpu.memory_space<vmem>>, vector<8x16xf32>
      tpu.vector_store %arg8[%c0_17, %c0_18], %21 {strides = array<i32>} : memref<8x16xf32, #tpu.memory_space<vmem>>, vector<8x16xf32>,
    } else {
    }
    %c0 = arith.constant 0 : index
    %c0_1 = arith.constant 0 : index
    %3 = vector.load %arg2[%c0, %c0_1] : memref<8x32xf32, #tpu.memory_space<vmem>>, vector<8x32xf32>
    %4 = arith.truncf %3 : vector<8x32xf32> to vector<8x32xbf16>
    %c0_2 = arith.constant 0 : index
    %c0_3 = arith.constant 0 : index
    %5 = vector.load %arg3[%c0_2, %c0_3] : memref<32x128xbf16, #tpu.memory_space<vmem>>, vector<32x128xbf16>
    %cst = arith.constant dense<0.000000e+00> : vector<8x128xf32>
    %6 = tpu.matmul %4, %5, %cst {dimension_numbers = #tpu.dot_dimension_numbers<[1], [0], [0], [1], [0, 0, 1, 1], [], []>} : vector<8x32xbf16>, vector<32x128xbf16>, vector<8x128xf32> -> vector<8x128xf32>
    %c0_4 = arith.constant 0 : index
    %c0_5 = arith.constant 0 : index
    %7 = vector.load %arg4[%c0_4, %c0_5] : memref<1x128xf32, #tpu.memory_space<vmem>>, vector<1x128xf32>
    %8 = vector.broadcast %7 : vector<1x128xf32> to vector<8x128xf32>
    %9 = arith.addf %6, %8 : vector<8x128xf32>
    %cst_6 = arith.constant 0.000000e+00 : f32
    %10 = vector.broadcast %cst_6 : f32 to vector<8x128xf32>
    %11 = arith.maximumf %9, %10 : vector<8x128xf32>
    %c0_7 = arith.constant 0 : index
    %c0_8 = arith.constant 0 : index
    %12 = vector.load %arg8[%c0_7, %c0_8] : memref<8x16xf32, #tpu.memory_space<vmem>>, vector<8x16xf32>
    %13 = arith.truncf %11 : vector<8x128xf32> to vector<8x128xbf16>
    %c0_9 = arith.constant 0 : index
    %c0_10 = arith.constant 0 : index
    %14 = vector.load %arg5[%c0_9, %c0_10] : memref<128x16xbf16, #tpu.memory_space<vmem>>, vector<128x16xbf16>
    %cst_11 = arith.constant dense<0.000000e+00> : vector<8x16xf32>
    %15 = tpu.matmul %13, %14, %cst_11 {dimension_numbers = #tpu.dot_dimension_numbers<[1], [0], [0], [1], [0, 0, 1, 1], [], []>} : vector<8x128xbf16>, vector<128x16xbf16>, vector<8x16xf32> -> vector<8x16xf32>
    %16 = arith.addf %12, %15 : vector<8x16xf32>
    %c0_12 = arith.constant 0 : index
    %c0_13 = arith.constant 0 : index
    %17 = vector.load %arg8[%c0_12, %c0_13] : memref<8x16xf32, #tpu.memory_space<vmem>>, vector<8x16xf32>
    tpu.vector_store %arg8[%c0_12, %c0_13], %16 {strides = array<i32>} : memref<8x16xf32, #tpu.memory_space<vmem>>, vector<8x16xf32>,
    %c0_i32_14 = arith.constant 0 : i32
    %18 = arith.cmpi eq, %arg1, %c0_i32_14 : i32
    %19 = arith.extui %18 : i1 to i32
    %c0_i32_15 = arith.constant 0 : i32
    %20 = arith.cmpi ne, %19, %c0_i32_15 : i32
    scf.if %20 {
      %c0_16 = arith.constant 0 : index
      %c0_17 = arith.constant 0 : index
      %21 = vector.load %arg8[%c0_16, %c0_17] : memref<8x16xf32, #tpu.memory_space<vmem>>, vector<8x16xf32>
      %c0_18 = arith.constant 0 : index
      %c0_19 = arith.constant 0 : index
      %22 = vector.load %arg6[%c0_18, %c0_19] : memref<1x16xf32, #tpu.memory_space<vmem>>, vector<1x16xf32>
      %23 = vector.broadcast %22 : vector<1x16xf32> to vector<8x16xf32>
      %24 = arith.addf %21, %23 : vector<8x16xf32>
      %cst_20 = arith.constant 0.000000e+00 : f32
      %25 = vector.broadcast %cst_20 : f32 to vector<8x16xf32>
      %26 = arith.maximumf %24, %25 : vector<8x16xf32>
      %c0_21 = arith.constant 0 : index
      %c0_22 = arith.constant 0 : index
      %27 = vector.load %arg7[%c0_21, %c0_22] : memref<8x16xf32, #tpu.memory_space<vmem>>, vector<8x16xf32>
      tpu.vector_store %arg7[%c0_21, %c0_22], %26 {strides = array<i32>} : memref<8x16xf32, #tpu.memory_space<vmem>>, vector<8x16xf32>,
    } else {
    }
    return
  }
  func.func @transform_0(%arg0: i32, %arg1: i32) -> (i32, i32) {
    %c0_i32 = arith.constant 0 : i32
    %c0_i32_0 = arith.constant 0 : i32
    return %arg0, %c0_i32 : i32, i32
  }
  func.func @transform_1(%arg0: i32, %arg1: i32) -> (i32, i32) {
    %c0_i32 = arith.constant 0 : i32
    %c0_i32_0 = arith.constant 0 : i32
    return %c0_i32, %arg1 : i32, i32
  }
  func.func @transform_2(%arg0: i32, %arg1: i32) -> (i32, i32) {
    %c0_i32 = arith.constant 0 : i32
    %c0_i32_0 = arith.constant 0 : i32
    return %c0_i32, %arg1 : i32, i32
  }
  func.func @transform_3(%arg0: i32, %arg1: i32) -> (i32, i32) {
    %c0_i32 = arith.constant 0 : i32
    %c0_i32_0 = arith.constant 0 : i32
    return %arg1, %c0_i32 : i32, i32
  }
  func.func @transform_4(%arg0: i32, %arg1: i32) -> (i32, i32) {
    %c0_i32 = arith.constant 0 : i32
    %c0_i32_0 = arith.constant 0 : i32
    %c0_i32_1 = arith.constant 0 : i32
    return %c0_i32, %c0_i32_0 : i32, i32
  }
  func.func @transform_5(%arg0: i32, %arg1: i32) -> (i32, i32) {
    %c0_i32 = arith.constant 0 : i32
    %c0_i32_0 = arith.constant 0 : i32
    return %arg0, %c0_i32 : i32, i32
  }
}

</mosaic_0001>

<llo_original>
// kernel: neural_layer_forward.1
$region0: #{neural_layer_forward.1}
  #allocation0 [shape = 'u32[]', space=smem, size = 0x4, offset = 0x4, fixed_abs, tag = 'smem constant byte address 0x4 - core index']
  #allocation1 [shape = 'u32[144,128]{1,0:T(1,128)}', space=vmem, size = 0x12000, scoped, tag = 'internal scratch']
  #allocation2 [shape = 'f32[8,16]{1,0:T(8,128)}', space=vmem, size = 0x1000, scoped, tag = 'scratch operand']
  %s0 = inlined_call_operand.vmem [shape: f32[8,32], index: 0, kind: input, shape index: {}]
  %s1 = inlined_call_operand.vmem [shape: bf16[32,128], index: 1, kind: input, shape index: {}]
  %s2 = inlined_call_operand.vmem [shape: f32[1,128], index: 2, kind: input, shape index: {}]
  %s3 = inlined_call_operand.vmem [shape: bf16[128,16], index: 3, kind: input, shape index: {}]
  %s4 = inlined_call_operand.vmem [shape: f32[1,16], index: 4, kind: input, shape index: {}]
  %s5 = inlined_call_operand.hbm [shape: f32[8,16], index: 5, kind: output, shape index: {}]
  %s6 = sld [smem:[#allocation0]]
  $region38: #{neural_layer_forward.1} parent=0
    _
  %s8 = ssub.s32 1, %s6
  %s9 = scalar_select 0, %s8, %s6
  $region1: #{neural_layer_forward.1} parent=0
    #allocation3 [shape = 'u8[4096]{0}', space=vmem, size = 0x1000, scoped, tag = 'output window, operand 0, single buffered']
    #allocation4 [shape = 's32[1]{0}', space=sflag, size = 0x4, scoped, tag = 'scoped memory for neural_layer_forward.1']
    %10 = vsyncpa [#allocation4], 0
    // Predicated region
    $region2: #{neural_layer_forward.1} parent=1 // pred_check
      _
    $region3: #{neural_layer_forward.1} parent=1 // pred_check_branch
      %12 = sbr.rel (0) target = $region5
    $region4: #{neural_layer_forward.1} parent=1 // pred_region
      _
    $region5: #{neural_layer_forward.1} parent=1 // pred_fallthru
      _
    // Predicated region
    $region6: #{neural_layer_forward.1} parent=1 // pred_check
      _
    $region7: #{neural_layer_forward.1} parent=1 // pred_check_branch
      %14 = sbr.rel (0) target = $region9
    $region8: #{neural_layer_forward.1} parent=1 // pred_region
      _
    $region9: #{neural_layer_forward.1} parent=1 // pred_fallthru
      _
    // Predicated region
    $region10: #{neural_layer_forward.1} parent=1 // pred_check
      _
    $region11: #{neural_layer_forward.1} parent=1 // pred_check_branch
      %16 = sbr.rel (0) target = $region13
    $region12: #{neural_layer_forward.1} parent=1 // pred_region
      _
    $region13: #{neural_layer_forward.1} parent=1 // pred_fallthru
      _
    // Predicated region
    $region14: #{neural_layer_forward.1} parent=1 // pred_check
      _
    $region15: #{neural_layer_forward.1} parent=1 // pred_check_branch
      %18 = sbr.rel (0) target = $region17
    $region16: #{neural_layer_forward.1} parent=1 // pred_region
      _
    $region17: #{neural_layer_forward.1} parent=1 // pred_fallthru
      _
    // Predicated region
    $region18: #{neural_layer_forward.1} parent=1 // pred_check
      _
    $region19: #{neural_layer_forward.1} parent=1 // pred_check_branch
      %20 = sbr.rel (0) target = $region21
    $region20: #{neural_layer_forward.1} parent=1 // pred_region
      _
    $region21: #{neural_layer_forward.1} parent=1 // pred_fallthru
      _
    %p22 = scmp.eq.s32.totalorder 0, 0
    // Predicated region
    $region22: #{neural_layer_forward.1} parent=1 // pred_check
      %p23 = pneg %p22
    $region23: #{neural_layer_forward.1} parent=1 // pred_check_branch
      %25 = sbr.rel (%p23) target = $region25
    $region24: #{neural_layer_forward.1} parent=1 // pred_region
      %vm26 = vcmask 130048
      %27 = vst.msk [vmem:[#allocation2] sm:$0xff] %vm26, 0.0
    $region25: #{neural_layer_forward.1} parent=1 // pred_fallthru
      _
    %v28 = vld [vmem:[%s0] sm:$0xff]
    %v29 = vpack.c.bf16 %v28, %v28
    %v30 = vld [vmem:[%s1] sm:$0xf]
    %v31 = vld [vmem:[%s1 + $0x4] sm:$0xf]
    %v32 = vld [vmem:[%s1 + $0x8] sm:$0xf]
    %v33 = vld [vmem:[%s1 + $0xc] sm:$0xf]
    %v34 = vld [vmem:[%s2] sm:$0x1]
    %v36 = vlaneseq
    %v37 = vshrl.u32 %v36, 7
    %v38 = vsub.s32 0, %v37
    %v39 = vrot.slane %v34, %v38
    %v45 = vunpack.c.l.b16 %v30
    %v46 = vunpack.c.l.b16 %v31
    %v47 = vunpack.c.l.b16 %v32
    %v48 = vunpack.c.l.b16 %v33
    %v49 = vpack.c.b16 %v46, %v45
    %v50 = vpack.c.b16 %v48, %v47
    %vm53 = vcmask 261120
    %v55 = vsel %vm53, %v29, 0
    %57 = vmatprep.subr.bf16.mxu0 0
    %58 = vmatpush1.bf16.msra.mxu0 %v49
    %59 = vmatprep.subr.bf16.mxu0 0
    %60 = vmatpush1.bf16.msra.mxu0 %v50
    %61 = vmatprep.subr.bf16.mxu0 0
    %62 = vmatpush1.bf16.msra.mxu0 0
    %63 = vmatprep.subr.bf16.mxu0 0
    %64 = vmatpush1.bf16.msra.mxu0 0
    %65 = vmatprep.subr.bf16.mxu0 0
    %66 = vmatpush1.bf16.msra.mxu0 0
    %67 = vmatprep.subr.bf16.mxu0 0
    %68 = vmatpush1.bf16.msra.mxu0 0
    %69 = vmatprep.subr.bf16.mxu0 0
    %70 = vmatpush1.bf16.msra.mxu0 0
    %71 = vmatprep.subr.bf16.mxu0 0
    %72 = vmatpush1.bf16.msra.mxu0 0
    %73 = vmatprep.subr.bf16.mxu0 0
    %74 = vmatpush1.bf16.msra.mxu0 0
    %75 = vmatprep.subr.bf16.mxu0 0
    %76 = vmatpush1.bf16.msra.mxu0 0
    %77 = vmatprep.subr.bf16.mxu0 0
    %78 = vmatpush1.bf16.msra.mxu0 0
    %79 = vmatprep.subr.bf16.mxu0 0
    %80 = vmatpush1.bf16.msra.mxu0 0
    %81 = vmatprep.subr.bf16.mxu0 0
    %82 = vmatpush1.bf16.msra.mxu0 0
    %83 = vmatprep.subr.bf16.mxu0 0
    %84 = vmatpush1.bf16.msra.mxu0 0
    %85 = vmatprep.subr.bf16.mxu0 0
    %86 = vmatpush1.bf16.msra.mxu0 0
    %87 = vmatprep.subr.bf16.mxu0 0
    %88 = vmatpush1.bf16.msra.mxu0 0
    %89 = vmatprep.mubr.bf16.mxu0 0
    %90 = vmatmul.mubr.bf16.gmra.mrb[0].mxu0 %v55
    %v91 = vpop.f32.mrb[0].mxu0
    %v92 = vadd.f32 %v39, %v91
    %v93 = vpop.f32.mrb[0].mxu0
    %v94 = vpop.f32.mrb[0].mxu0
    %v95 = vpop.f32.mrb[0].mxu0
    %96 = vdwg.mxu0
    %v97 = vmax.f32 %v92, 0.0
    %v98 = vld [vmem:[#allocation2] sm:$0xff]
    %v99 = vpack.c.bf16 %v97, %v97
    %v100 = vld [vmem:[%s3] sm:$0xf]
    %v101 = vld [vmem:[%s3 + $0x4] sm:$0xf]
    %v102 = vld [vmem:[%s3 + $0x8] sm:$0xf]
    %v103 = vld [vmem:[%s3 + $0xc] sm:$0xf]
    %v104 = vld [vmem:[%s3 + $0x10] sm:$0xf]
    %v105 = vld [vmem:[%s3 + $0x14] sm:$0xf]
    %v106 = vld [vmem:[%s3 + $0x18] sm:$0xf]
    %v107 = vld [vmem:[%s3 + $0x1c] sm:$0xf]
    %v108 = vld [vmem:[%s3 + $0x20] sm:$0xf]
    %v109 = vld [vmem:[%s3 + $0x24] sm:$0xf]
    %v110 = vld [vmem:[%s3 + $0x28] sm:$0xf]
    %v111 = vld [vmem:[%s3 + $0x2c] sm:$0xf]
    %v112 = vld [vmem:[%s3 + $0x30] sm:$0xf]
    %v113 = vld [vmem:[%s3 + $0x34] sm:$0xf]
    %v114 = vld [vmem:[%s3 + $0x38] sm:$0xf]
    %v115 = vld [vmem:[%s3 + $0x3c] sm:$0xf]
    %v132 = vunpack.c.l.b16 %v100
    %v133 = vunpack.c.l.b16 %v101
    %v134 = vunpack.c.l.b16 %v102
    %v135 = vunpack.c.l.b16 %v103
    %v136 = vunpack.c.l.b16 %v104
    %v137 = vunpack.c.l.b16 %v105
    %v138 = vunpack.c.l.b16 %v106
    %v139 = vunpack.c.l.b16 %v107
    %v140 = vunpack.c.l.b16 %v108
    %v141 = vunpack.c.l.b16 %v109
    %v142 = vunpack.c.l.b16 %v110
    %v143 = vunpack.c.l.b16 %v111
    %v144 = vunpack.c.l.b16 %v112
    %v145 = vunpack.c.l.b16 %v113
    %v146 = vunpack.c.l.b16 %v114
    %v147 = vunpack.c.l.b16 %v115
    %v148 = vpack.c.b16 %v133, %v132
    %v149 = vpack.c.b16 %v135, %v134
    %v150 = vpack.c.b16 %v137, %v136
    %v151 = vpack.c.b16 %v139, %v138
    %v152 = vpack.c.b16 %v141, %v140
    %v153 = vpack.c.b16 %v143, %v142
    %v154 = vpack.c.b16 %v145, %v144
    %v155 = vpack.c.b16 %v147, %v146
    %164 = vmatprep.subr.bf16.mxu0 0
    %165 = vmatpush1.bf16.msra.mxu0 %v148
    %166 = vmatprep.subr.bf16.mxu0 0
    %167 = vmatpush1.bf16.msra.mxu0 %v149
    %168 = vmatprep.subr.bf16.mxu0 0
    %169 = vmatpush1.bf16.msra.mxu0 %v150
    %170 = vmatprep.subr.bf16.mxu0 0
    %171 = vmatpush1.bf16.msra.mxu0 %v151
    %172 = vmatprep.subr.bf16.mxu0 0
    %173 = vmatpush1.bf16.msra.mxu0 %v152
    %174 = vmatprep.subr.bf16.mxu0 0
    %175 = vmatpush1.bf16.msra.mxu0 %v153
    %176 = vmatprep.subr.bf16.mxu0 0
    %177 = vmatpush1.bf16.msra.mxu0 %v154
    %178 = vmatprep.subr.bf16.mxu0 0
    %179 = vmatpush1.bf16.msra.mxu0 %v155
    %180 = vmatprep.subr.bf16.mxu0 0
    %181 = vmatpush1.bf16.msra.mxu0 0
    %182 = vmatprep.subr.bf16.mxu0 0
    %183 = vmatpush1.bf16.msra.mxu0 0
    %184 = vmatprep.subr.bf16.mxu0 0
    %185 = vmatpush1.bf16.msra.mxu0 0
    %186 = vmatprep.subr.bf16.mxu0 0
    %187 = vmatpush1.bf16.msra.mxu0 0
    %188 = vmatprep.subr.bf16.mxu0 0
    %189 = vmatpush1.bf16.msra.mxu0 0
    %190 = vmatprep.subr.bf16.mxu0 0
    %191 = vmatpush1.bf16.msra.mxu0 0
    %192 = vmatprep.subr.bf16.mxu0 0
    %193 = vmatpush1.bf16.msra.mxu0 0
    %194 = vmatprep.subr.bf16.mxu0 0
    %195 = vmatpush1.bf16.msra.mxu0 0
    %196 = vmatprep.mubr.bf16.mxu0 0
    %197 = vmatmul.mubr.bf16.gmra.mrb[0].mxu0 %v99
    %v198 = vpop.f32.mrb[0].mxu0
    %v199 = vadd.f32 0.0, %v198
    %v200 = vpop.f32.mrb[0].mxu0
    %v201 = vpop.f32.mrb[0].mxu0
    %v202 = vpop.f32.mrb[0].mxu0
    %203 = vdwg.mxu0
    %v204 = vadd.f32 %v98, %v199
    %vm205 = vcmask 130048
    %206 = vst.msk [vmem:[#allocation2] sm:$0xff] %vm205, %v204
    // Predicated region
    $region26: #{neural_layer_forward.1} parent=1 // pred_check
      %p207 = pneg %p22
    $region27: #{neural_layer_forward.1} parent=1 // pred_check_branch
      %209 = sbr.rel (%p207) target = $region29
    $region28: #{neural_layer_forward.1} parent=1 // pred_region
      %v210 = vld [vmem:[#allocation2] sm:$0xff]
      %v211 = vld [vmem:[%s4] sm:$0x1]
      %v213 = vlaneseq
      %v214 = vshrl.u32 %v213, 7
      %v215 = vsub.s32 0, %v214
      %v216 = vrot.slane %v211, %v215
      %v218 = vadd.f32 %v210, %v216
      %v219 = vmax.f32 %v218, 0.0
      %220 = vst.msk [vmem:[#allocation3] sm:$0xff] %vm205, %v219
    $region29: #{neural_layer_forward.1} parent=1 // pred_fallthru
      _
    // Predicated region
    $region30: #{neural_layer_forward.1} parent=1 // pred_check
      _
    $region31: #{neural_layer_forward.1} parent=1 // pred_check_branch
      %222 = sbr.rel (0) target = $region33
    $region32: #{neural_layer_forward.1} parent=1 // pred_region
      %s224 = ssub.s32 128, 128
      %225 = vsyncadd [#allocation4], %s224
      %s227 = sshll.u32 [#allocation3], 4
      %s228 = int_to_ptr.vmem [resolvable:$true] %s227
      %230 = dma.vmem_to_hbm [thread:$0]  %s228, 128, %s5, [#allocation4]
    $region33: #{neural_layer_forward.1} parent=1 // pred_fallthru
      _
    // Predicated region
    $region34: #{neural_layer_forward.1} parent=1 // pred_check
      _
    $region35: #{neural_layer_forward.1} parent=1 // pred_check_branch
      %232 = sbr.rel (0) target = $region37
    $region36: #{neural_layer_forward.1} parent=1 // pred_region
      %233 = dma.done [#allocation4], 128
    $region37: #{neural_layer_forward.1} parent=1 // pred_fallthru
      _
    %234 = vsyncpa [#allocation4], 1

</llo_original>
